<compile_context>
chip_gen: v6e
topology: v6e:2x2x1
jax: 0.10.0
libtpu: 0.0.40
codegen_flags: <defaults>
</compile_context>

<pallas_src>
import jax
import jax.numpy as jnp
from jax.experimental import pallas as pl
from jax.experimental.pallas import tpu as pltpu

IN_F = 20
HID = 50
OUT_F = 1
NEG_SLOPE = 0.01          # torch.nn.LeakyReLU default
LANE = 128
TB_MAX = 16384            # batch-tile upper bound (multiple of 128)
VMEM_LIMIT = 48 * 1024 * 1024  # explicit scoped-VMEM budget (safe on v5e/v6e/v7x)

SIN_F = 2 * IN_F          # 40  : stacked feature dim  [n0; n1]
SHID = 2 * HID            # 100 : stacked hidden dim   [h0; h1]


def ranknet_kernel(x_ref, w1_ref, b1_ref, w2c_ref, out_ref):
    """One batch tile, feature-major layout (batch in lanes).

    x_ref   : (SIN_F, TB)  bf16   stacked inputs [n0; n1]
    w1_ref  : (SHID, SIN_F) bf16  block-diagonal W1
    b1_ref  : (SHID, 1)    f32    stacked bias [b1; b1]
    w2c_ref : (SHID, 1)    f32    signed output weights [-w2; +w2]
    out_ref : (OUT_F, TB)  f32
    """
    # Layer 1 on the MXU: one bf16 matmul for BOTH pair members, f32 accumulation.
    h = jnp.dot(w1_ref[...], x_ref[...], preferred_element_type=jnp.float32)
    h = h + b1_ref[...]
    # LeakyReLU as max(h, a*h): exact for slope < 1, one vmul + vmax on the VPU.
    h = jnp.maximum(h, NEG_SLOPE * h)
    # Output layer off the MXU: broadcast-multiply (VPU) + cross-sublane reduce (XLU).
    #   sum(w2c * h, axis=0) = -w2 @ lrelu(h0) + w2 @ lrelu(h1) = s1 - s0  (b2 cancels)
    s = jnp.sum(w2c_ref[...] * h, axis=0, keepdims=True)
    out_ref[...] = jax.nn.sigmoid(s)          # EUP


def make_stacked_params(w1, b1, w2):
    """Build the kernel's stacked/fused parameters once (outside the hot loop).

    w1: (HID, IN_F) f32, b1: (HID, 1) f32, w2: (OUT_F, HID) f32  (PyTorch layout).
    """
    z = jnp.zeros_like(w1)
    w1s = jnp.block([[w1, z], [z, w1]]).astype(jnp.bfloat16)        # (100, 40) bf16
    b1s = jnp.concatenate([b1, b1], axis=0)                         # (100, 1)  f32
    w2c = jnp.concatenate([-w2, w2], axis=1).reshape(SHID, 1)       # (100, 1)  f32
    return w1s, b1s, w2c


def _round_up(x, m):
    return ((x + m - 1) // m) * m


def _pick_tile(b_lane, tb_max):
    """Pick a lane-aligned batch tile; >=2 grid steps when the batch allows it."""
    if b_lane <= LANE:
        return b_lane                                   # single small block
    if b_lane > tb_max:
        return tb_max                                   # grid already has >=2 steps
    # Split into 2 steps so both v7x TensorCores get work; waste < 256 columns.
    return _round_up(-(-b_lane // 2), LANE)


def ranknet_forward(n0_t, n1_t, stacked_params, *, tb_max=TB_MAX):
    """n0_t, n1_t: (IN_F, B) feature-major f32 inputs. Returns (B, 1) probabilities."""
    w1s, b1s, w2c = stacked_params
    in_f, B = n0_t.shape
    assert in_f == IN_F and n1_t.shape == (IN_F, B)

    # Stack the pair along features and cast to bf16 once (one input DMA stream,
    # half the HBM bytes). NOTE: for repeated calls, produce X in bf16 upstream.
    x = jnp.concatenate([n0_t, n1_t], axis=0).astype(jnp.bfloat16)   # (40, B)

    b_lane = _round_up(B, LANE)
    tb = _pick_tile(b_lane, tb_max)
    B_pad = _round_up(b_lane, tb)                      # only the tail tile is padded
    if B_pad != B:
        x = jnp.pad(x, ((0, 0), (0, B_pad - B)))

    grid = (B_pad // tb,)

    out = pl.pallas_call(
        ranknet_kernel,
        out_shape=jax.ShapeDtypeStruct((OUT_F, B_pad), jnp.float32),
        grid=grid,
        in_specs=[
            pl.BlockSpec((SIN_F, tb), lambda i: (0, i)),       # stacked input tile
            pl.BlockSpec((SHID, SIN_F), lambda i: (0, 0)),     # W1 block-diag (resident)
            pl.BlockSpec((SHID, 1), lambda i: (0, 0)),         # b1 stacked   (resident)
            pl.BlockSpec((SHID, 1), lambda i: (0, 0)),         # [-w2; +w2]   (resident)
        ],
        out_specs=pl.BlockSpec((OUT_F, tb), lambda i: (0, i)),
        compiler_params=pltpu.CompilerParams(
            dimension_semantics=("parallel",),
            vmem_limit_bytes=VMEM_LIMIT,
        ),
    )(x, w1s, b1s, w2c)

    return out[:, :B].T   # (B, 1), matching the PyTorch module's output shape


def init_params(key):
    """PyTorch Linear default init, PyTorch (out, in) layout."""
    k1, k2, k3, k4 = jax.random.split(key, 4)
    bound1 = 1.0 / jnp.sqrt(IN_F)
    bound2 = 1.0 / jnp.sqrt(HID)
    w1 = jax.random.uniform(k1, (HID, IN_F), jnp.float32, -bound1, bound1)
    b1 = jax.random.uniform(k2, (HID, 1), jnp.float32, -bound1, bound1)
    w2 = jax.random.uniform(k3, (OUT_F, HID), jnp.float32, -bound2, bound2)
    b2 = jax.random.uniform(k4, (OUT_F, 1), jnp.float32, -bound2, bound2)
    return w1, b1, w2, b2


def ranknet_reference(n0_t, n1_t, w1, b1, w2, b2):
    """Pure-JAX f32 reference including b2 (which mathematically cancels)."""
    def node(x):
        h = w1 @ x + b1
        h = jnp.where(h > 0, h, NEG_SLOPE * h)
        return w2 @ h + b2
    return jax.nn.sigmoid(-node(n0_t) + node(n1_t)).T  # (B, 1)


if __name__ == "__main__":
    key = jax.random.PRNGKey(0)
    kp, k0, k1 = jax.random.split(key, 3)
    w1, b1, w2, b2 = init_params(kp)
    stacked = make_stacked_params(w1, b1, w2)

    B = 8
    # Data produced directly in feature-major (IN_F, B) layout — no XLA transpose
    # in front of the kernel call.
    n0_t = jax.random.normal(k0, (IN_F, B), jnp.float32)
    n1_t = jax.random.normal(k1, (IN_F, B), jnp.float32)

    out = ranknet_forward(n0_t, n1_t, stacked)
    out = jax.block_until_ready(out)

    ref = ranknet_reference(n0_t, n1_t, w1, b1, w2, b2)
    assert out.shape == (B, OUT_F)
    # bf16 matmul operands / bf16 inputs -> loosened tolerance vs the f32 reference.
    assert jnp.allclose(out, ref, atol=2e-2, rtol=2e-2), "mismatch vs pure-JAX reference"

    print("KERNEL_OK")
</pallas_src>

<mosaic_0001>
module attributes {stable_mosaic.version = 11 : i64} {
  func.func @ranknet_kernel(%arg0: i32, %arg1: memref<40x128xbf16, #tpu.memory_space<vmem>>, %arg2: memref<100x40xbf16, #tpu.memory_space<vmem>>, %arg3: memref<100x1xf32, #tpu.memory_space<vmem>>, %arg4: memref<100x1xf32, #tpu.memory_space<vmem>>, %arg5: memref<1x128xf32, #tpu.memory_space<vmem>>) attributes {dimension_semantics = [#tpu.dimension_semantics<parallel>], iteration_bounds = array<i64: 1>, scalar_prefetch = 0 : i64, scratch_operands = 0 : i64, tpu.core_type = #tpu.core_type<tc>, window_params = [{transform_indices = @transform_0, window_bounds = array<i64: 40, 128>}, {pipeline_mode = #tpu.pipeline_mode<synchronous>, transform_indices = @transform_1, window_bounds = array<i64: 100, 40>}, {pipeline_mode = #tpu.pipeline_mode<synchronous>, transform_indices = @transform_2, window_bounds = array<i64: 100, 1>}, {pipeline_mode = #tpu.pipeline_mode<synchronous>, transform_indices = @transform_3, window_bounds = array<i64: 100, 1>}, {transform_indices = @transform_4, window_bounds = array<i64: 1, 128>}]} {
    %c0 = arith.constant 0 : index
    %c0_0 = arith.constant 0 : index
    %0 = vector.load %arg2[%c0, %c0_0] : memref<100x40xbf16, #tpu.memory_space<vmem>>, vector<100x40xbf16>
    %c0_1 = arith.constant 0 : index
    %c0_2 = arith.constant 0 : index
    %1 = vector.load %arg1[%c0_1, %c0_2] : memref<40x128xbf16, #tpu.memory_space<vmem>>, vector<40x128xbf16>
    %cst = arith.constant dense<0.000000e+00> : vector<100x128xf32>
    %2 = tpu.matmul %0, %1, %cst {dimension_numbers = #tpu.dot_dimension_numbers<[1], [0], [0], [1], [0, 0, 1, 1], [], []>} : vector<100x40xbf16>, vector<40x128xbf16>, vector<100x128xf32> -> vector<100x128xf32>
    %c0_3 = arith.constant 0 : index
    %c0_4 = arith.constant 0 : index
    %3 = vector.load %arg3[%c0_3, %c0_4] : memref<100x1xf32, #tpu.memory_space<vmem>>, vector<100x1xf32>
    %4 = vector.broadcast %3 : vector<100x1xf32> to vector<100x128xf32>
    %5 = arith.addf %2, %4 : vector<100x128xf32>
    %cst_5 = arith.constant 0.00999999977 : f32
    %6 = vector.broadcast %cst_5 : f32 to vector<100x128xf32>
    %7 = arith.mulf %6, %5 : vector<100x128xf32>
    %8 = arith.maximumf %5, %7 : vector<100x128xf32>
    %c0_6 = arith.constant 0 : index
    %c0_7 = arith.constant 0 : index
    %9 = vector.load %arg4[%c0_6, %c0_7] : memref<100x1xf32, #tpu.memory_space<vmem>>, vector<100x1xf32>
    %10 = vector.broadcast %9 : vector<100x1xf32> to vector<100x128xf32>
    %11 = arith.mulf %10, %8 : vector<100x128xf32>
    %cst_8 = arith.constant dense<0.000000e+00> : vector<128xf32>
    %12 = vector.multi_reduction <add>, %11, %cst_8 [0] : vector<100x128xf32> to vector<128xf32>
    %13 = vector.shape_cast %12 : vector<128xf32> to vector<1x128xf32>
    %14 = arith.negf %13 : vector<1x128xf32>
    %15 = math.exp %14 : vector<1x128xf32>
    %cst_9 = arith.constant 1.000000e+00 : f32
    %16 = vector.broadcast %cst_9 : f32 to vector<1x128xf32>
    %17 = arith.addf %16, %15 : vector<1x128xf32>
    %18 = arith.divf %16, %17 : vector<1x128xf32>
    %c0_10 = arith.constant 0 : index
    %c0_11 = arith.constant 0 : index
    %19 = vector.load %arg5[%c0_10, %c0_11] : memref<1x128xf32, #tpu.memory_space<vmem>>, vector<1x128xf32>
    tpu.vector_store %arg5[%c0_10, %c0_11], %18 {strides = array<i32>} : memref<1x128xf32, #tpu.memory_space<vmem>>, vector<1x128xf32>,
    return
  }
  func.func @transform_0(%arg0: i32) -> (i32, i32) {
    %c0_i32 = arith.constant 0 : i32
    %c0_i32_0 = arith.constant 0 : i32
    return %c0_i32, %arg0 : i32, i32
  }
  func.func @transform_1(%arg0: i32) -> (i32, i32) {
    %c0_i32 = arith.constant 0 : i32
    %c0_i32_0 = arith.constant 0 : i32
    %c0_i32_1 = arith.constant 0 : i32
    return %c0_i32, %c0_i32_0 : i32, i32
  }
  func.func @transform_2(%arg0: i32) -> (i32, i32) {
    %c0_i32 = arith.constant 0 : i32
    %c0_i32_0 = arith.constant 0 : i32
    %c0_i32_1 = arith.constant 0 : i32
    return %c0_i32, %c0_i32_0 : i32, i32
  }
  func.func @transform_3(%arg0: i32) -> (i32, i32) {
    %c0_i32 = arith.constant 0 : i32
    %c0_i32_0 = arith.constant 0 : i32
    %c0_i32_1 = arith.constant 0 : i32
    return %c0_i32, %c0_i32_0 : i32, i32
  }
  func.func @transform_4(%arg0: i32) -> (i32, i32) {
    %c0_i32 = arith.constant 0 : i32
    %c0_i32_0 = arith.constant 0 : i32
    return %c0_i32, %arg0 : i32, i32
  }
}

</mosaic_0001>

<llo_original>
// kernel: tpu_custom_call.1
$region0: #{tpu_custom_call.1}
  #allocation0 [shape = 'u32[]', space=smem, size = 0x4, offset = 0x4, fixed_abs, tag = 'smem constant byte address 0x4 - core index']
  #allocation1 [shape = 'u32[144,128]{1,0:T(1,128)}', space=vmem, size = 0x12000, scoped, tag = 'internal scratch']
  %s0 = inlined_call_operand.vmem [shape: bf16[40,128], index: 0, kind: input, shape index: {}]
  %s1 = inlined_call_operand.vmem [shape: bf16[100,40], index: 1, kind: input, shape index: {}]
  %s2 = inlined_call_operand.vmem [shape: f32[100,1], index: 2, kind: input, shape index: {}]
  %s3 = inlined_call_operand.vmem [shape: f32[100,1], index: 3, kind: input, shape index: {}]
  %s4 = inlined_call_operand.hbm [shape: f32[1,128], index: 4, kind: output, shape index: {}]
  %s5 = sld [smem:[#allocation0]]
  $region26: #{tpu_custom_call.1} parent=0
    _
  %s7 = ssub.s32 1, %s5
  %s8 = scalar_select 0, %s7, %s5
  $region1: #{tpu_custom_call.1} parent=0
    #allocation2 [shape = 'u8[512]{0}', space=vmem, size = 0x400, scoped, tag = 'output window, operand 0, single buffered']
    #allocation3 [shape = 's32[1]{0}', space=sflag, size = 0x4, scoped, tag = 'scoped memory for tpu_custom_call.1']
    %9 = vsyncpa [#allocation3], 0
    // Predicated region
    $region2: #{tpu_custom_call.1} parent=1 // pred_check
      _
    $region3: #{tpu_custom_call.1} parent=1 // pred_check_branch
      %11 = sbr.rel (0) target = $region5
    $region4: #{tpu_custom_call.1} parent=1 // pred_region
      _
    $region5: #{tpu_custom_call.1} parent=1 // pred_fallthru
      _
    // Predicated region
    $region6: #{tpu_custom_call.1} parent=1 // pred_check
      _
    $region7: #{tpu_custom_call.1} parent=1 // pred_check_branch
      %13 = sbr.rel (0) target = $region9
    $region8: #{tpu_custom_call.1} parent=1 // pred_region
      _
    $region9: #{tpu_custom_call.1} parent=1 // pred_fallthru
      _
    // Predicated region
    $region10: #{tpu_custom_call.1} parent=1 // pred_check
      _
    $region11: #{tpu_custom_call.1} parent=1 // pred_check_branch
      %15 = sbr.rel (0) target = $region13
    $region12: #{tpu_custom_call.1} parent=1 // pred_region
      _
    $region13: #{tpu_custom_call.1} parent=1 // pred_fallthru
      _
    // Predicated region
    $region14: #{tpu_custom_call.1} parent=1 // pred_check
      _
    $region15: #{tpu_custom_call.1} parent=1 // pred_check_branch
      %17 = sbr.rel (0) target = $region17
    $region16: #{tpu_custom_call.1} parent=1 // pred_region
      _
    $region17: #{tpu_custom_call.1} parent=1 // pred_fallthru
      _
    %v19 = vld [vmem:[%s1] sm:$0xf]
    %v20 = vld [vmem:[%s1 + $0x4] sm:$0xf]
    %v21 = vld [vmem:[%s1 + $0x8] sm:$0xf]
    %v22 = vld [vmem:[%s1 + $0xc] sm:$0xf]
    %v23 = vld [vmem:[%s1 + $0x10] sm:$0xf]
    %v24 = vld [vmem:[%s1 + $0x14] sm:$0xf]
    %v25 = vld [vmem:[%s1 + $0x18] sm:$0xf]
    %v26 = vld [vmem:[%s1 + $0x1c] sm:$0xf]
    %v27 = vld [vmem:[%s1 + $0x20] sm:$0xf]
    %v28 = vld [vmem:[%s1 + $0x24] sm:$0xf]
    %v29 = vld [vmem:[%s1 + $0x28] sm:$0xf]
    %v30 = vld [vmem:[%s1 + $0x2c] sm:$0xf]
    %v31 = vld [vmem:[%s1 + $0x30] sm:$0x3]
    %v32 = vld [vmem:[%s0] sm:$0xf]
    %v33 = vld [vmem:[%s0 + $0x4] sm:$0xf]
    %v34 = vld [vmem:[%s0 + $0x8] sm:$0xf]
    %v35 = vld [vmem:[%s0 + $0xc] sm:$0xf]
    %v36 = vld [vmem:[%s0 + $0x10] sm:$0xf]
    %v37 = vld [vmem:[%s2] sm:$0xff]
    %v38 = vld [vmem:[%s2 + $0x8] sm:$0xff]
    %v39 = vld [vmem:[%s2 + $0x10] sm:$0xff]
    %v40 = vld [vmem:[%s2 + $0x18] sm:$0xff]
    %v41 = vld [vmem:[%s2 + $0x20] sm:$0xff]
    %v42 = vld [vmem:[%s2 + $0x28] sm:$0xff]
    %v43 = vld [vmem:[%s2 + $0x30] sm:$0xff]
    %v44 = vld [vmem:[%s2 + $0x38] sm:$0xff]
    %v45 = vld [vmem:[%s2 + $0x40] sm:$0xff]
    %v46 = vld [vmem:[%s2 + $0x48] sm:$0xff]
    %v47 = vld [vmem:[%s2 + $0x50] sm:$0xff]
    %v48 = vld [vmem:[%s2 + $0x58] sm:$0xff]
    %v49 = vld [vmem:[%s2 + $0x60] sm:$0xf]
    %51 = vset.pattern.permute.xlu0 0
    %52 = vperm.xlu0 %51, %v37
    %v53 = vpop.permute.xlu0 %52
    %56 = vset.pattern.permute.xlu0 0
    %57 = vperm.xlu0 %56, %v38
    %v58 = vpop.permute.xlu0 %57
    %61 = vset.pattern.permute.xlu0 0
    %62 = vperm.xlu0 %61, %v39
    %v63 = vpop.permute.xlu0 %62
    %66 = vset.pattern.permute.xlu0 0
    %67 = vperm.xlu0 %66, %v40
    %v68 = vpop.permute.xlu0 %67
    %71 = vset.pattern.permute.xlu0 0
    %72 = vperm.xlu0 %71, %v41
    %v73 = vpop.permute.xlu0 %72
    %76 = vset.pattern.permute.xlu0 0
    %77 = vperm.xlu0 %76, %v42
    %v78 = vpop.permute.xlu0 %77
    %81 = vset.pattern.permute.xlu0 0
    %82 = vperm.xlu0 %81, %v43
    %v83 = vpop.permute.xlu0 %82
    %86 = vset.pattern.permute.xlu0 0
    %87 = vperm.xlu0 %86, %v44
    %v88 = vpop.permute.xlu0 %87
    %91 = vset.pattern.permute.xlu0 0
    %92 = vperm.xlu0 %91, %v45
    %v93 = vpop.permute.xlu0 %92
    %96 = vset.pattern.permute.xlu0 0
    %97 = vperm.xlu0 %96, %v46
    %v98 = vpop.permute.xlu0 %97
    %101 = vset.pattern.permute.xlu0 0
    %102 = vperm.xlu0 %101, %v47
    %v103 = vpop.permute.xlu0 %102
    %106 = vset.pattern.permute.xlu0 0
    %107 = vperm.xlu0 %106, %v48
    %v108 = vpop.permute.xlu0 %107
    %111 = vset.pattern.permute.xlu0 0
    %112 = vperm.xlu0 %111, %v49
    %v113 = vpop.permute.xlu0 %112
    %v128 = vunpack.c.l.b16 %v19
    %v129 = vunpack.c.l.b16 %v20
    %v130 = vunpack.c.l.b16 %v21
    %v131 = vunpack.c.l.b16 %v22
    %v132 = vunpack.c.l.b16 %v23
    %v133 = vunpack.c.l.b16 %v24
    %v134 = vunpack.c.l.b16 %v25
    %v135 = vunpack.c.l.b16 %v26
    %v136 = vunpack.c.l.b16 %v27
    %v137 = vunpack.c.l.b16 %v28
    %v138 = vunpack.c.l.b16 %v29
    %v139 = vunpack.c.l.b16 %v30
    %v140 = vunpack.c.l.b16 %v31
    %v141 = vpack.c.b16 %v129, %v128
    %v142 = vpack.c.b16 %v131, %v130
    %v143 = vpack.c.b16 %v133, %v132
    %v144 = vpack.c.b16 %v135, %v134
    %v145 = vpack.c.b16 %v137, %v136
    %v146 = vpack.c.b16 %v139, %v138
    %v147 = vpack.c.b16 %v140, %v140
    %v153 = vunpack.c.l.b16 %v32
    %v154 = vunpack.c.l.b16 %v33
    %v155 = vunpack.c.l.b16 %v34
    %v156 = vunpack.c.l.b16 %v35
    %v157 = vunpack.c.l.b16 %v36
    %v158 = vpack.c.b16 %v154, %v153
    %v159 = vpack.c.b16 %v156, %v155
    %v160 = vpack.c.b16 %v157, %v157
    %vm163 = vcmask 326656
    %v165 = vsel %vm163, %v141, 0
    %v168 = vsel %vm163, %v142, 0
    %v171 = vsel %vm163, %v143, 0
    %v174 = vsel %vm163, %v144, 0
    %v177 = vsel %vm163, %v145, 0
    %v180 = vsel %vm163, %v146, 0
    %v183 = vsel %vm163, %v147, 0
    %vm185 = vcmask 1043456
    %v187 = vsel %vm185, %v160, 0
    %189 = vmatprep.subr.bf16.mxu0 0
    %190 = vmatpush1.bf16.msra.mxu0 0
    %191 = vmatprep.subr.bf16.mxu0 0
    %192 = vmatpush1.bf16.msra.mxu0 0
    %193 = vmatprep.subr.bf16.mxu0 0
    %194 = vmatpush1.bf16.msra.mxu0 0
    %195 = vmatprep.subr.bf16.mxu0 0
    %196 = vmatpush1.bf16.msra.mxu0 0
    %197 = vmatprep.subr.bf16.mxu0 0
    %198 = vmatpush1.bf16.msra.mxu0 0
    %199 = vmatprep.subr.bf16.mxu0 0
    %200 = vmatpush1.bf16.msra.mxu0 %v187
    %201 = vmatprep.subr.bf16.mxu0 0
    %202 = vmatpush1.bf16.msra.mxu0 %v159
    %203 = vmatprep.subr.bf16.mxu0 0
    %204 = vmatpush1.bf16.msra.mxu0 %v158
    %205 = vmatprep.subr.bf16.mxu0 0
    %206 = vmatpush2.bf16.msra.mxu0 0
    %207 = vmatprep.subr.bf16.mxu0 0
    %208 = vmatpush2.bf16.msra.mxu0 0
    %209 = vmatprep.subr.bf16.mxu0 0
    %210 = vmatpush2.bf16.msra.mxu0 0
    %211 = vmatprep.subr.bf16.mxu0 0
    %212 = vmatpush2.bf16.msra.mxu0 0
    %213 = vmatprep.subr.bf16.mxu0 0
    %214 = vmatpush2.bf16.msra.mxu0 0
    %215 = vmatprep.subr.bf16.mxu0 0
    %216 = vmatpush2.bf16.msra.mxu0 0
    %217 = vmatprep.subr.bf16.mxu0 0
    %218 = vmatpush2.bf16.msra.mxu0 0
    %219 = vmatprep.subr.bf16.mxu0 0
    %220 = vmatpush2.bf16.msra.mxu0 0
    %221 = vmatprep.mubr.bf16.mxu0 0
    %222 = vmatmul.mubr.bf16.gmra.mxu0 %v165
    %v223 = vpop.f32.mrf.mxu0
    %v224 = vadd.f32 %v53, %v223
    %v225 = vpop.f32.mrf.mxu0
    %v226 = vpop.f32.mrf.mxu0
    %v227 = vadd.f32 %v58, %v226
    %v228 = vpop.f32.mrf.mxu0
    %229 = vmatprep.mubr.bf16.mxu0 0
    %230 = vmatmul.mubr.bf16.gmra.mxu0 %v168
    %v231 = vpop.f32.mrf.mxu0
    %v232 = vadd.f32 %v63, %v231
    %v233 = vpop.f32.mrf.mxu0
    %v234 = vpop.f32.mrf.mxu0
    %v235 = vadd.f32 %v68, %v234
    %v236 = vpop.f32.mrf.mxu0
    %237 = vmatprep.mubr.bf16.mxu0 0
    %238 = vmatmul.mubr.bf16.gmra.mxu0 %v171
    %v239 = vpop.f32.mrf.mxu0
    %v240 = vadd.f32 %v73, %v239
    %v241 = vpop.f32.mrf.mxu0
    %v242 = vpop.f32.mrf.mxu0
    %v243 = vadd.f32 %v78, %v242
    %v244 = vpop.f32.mrf.mxu0
    %245 = vmatprep.mubr.bf16.mxu0 0
    %246 = vmatmul.mubr.bf16.gmra.mxu0 %v174
    %v247 = vpop.f32.mrf.mxu0
    %v248 = vadd.f32 %v83, %v247
    %v249 = vpop.f32.mrf.mxu0
    %v250 = vpop.f32.mrf.mxu0
    %v251 = vadd.f32 %v88, %v250
    %v252 = vpop.f32.mrf.mxu0
    %253 = vmatprep.mubr.bf16.mxu0 0
    %254 = vmatmul.mubr.bf16.gmra.mxu0 %v177
    %v255 = vpop.f32.mrf.mxu0
    %v256 = vadd.f32 %v93, %v255
    %v257 = vpop.f32.mrf.mxu0
    %v258 = vpop.f32.mrf.mxu0
    %v259 = vadd.f32 %v98, %v258
    %v260 = vpop.f32.mrf.mxu0
    %261 = vmatprep.mubr.bf16.mxu0 0
    %262 = vmatmul.mubr.bf16.gmra.mxu0 %v180
    %v263 = vpop.f32.mrf.mxu0
    %v264 = vadd.f32 %v103, %v263
    %v265 = vpop.f32.mrf.mxu0
    %v266 = vpop.f32.mrf.mxu0
    %v267 = vadd.f32 %v108, %v266
    %v268 = vpop.f32.mrf.mxu0
    %269 = vmatprep.mubr.bf16.mxu0 0
    %270 = vmatmul.mubr.bf16.gmra.mxu0 %v183
    %v271 = vpop.f32.mrf.mxu0
    %v272 = vadd.f32 %v113, %v271
    %v273 = vpop.f32.mrf.mxu0
    %v274 = vpop.f32.mrf.mxu0
    %v275 = vpop.f32.mrf.mxu0
    %276 = vdwg.mxu0
    %v277 = vmul.f32 %v224, 0.01
    %v278 = vmul.f32 %v227, 0.01
    %v279 = vmul.f32 %v232, 0.01
    %v280 = vmul.f32 %v235, 0.01
    %v281 = vmul.f32 %v240, 0.01
    %v282 = vmul.f32 %v243, 0.01
    %v283 = vmul.f32 %v248, 0.01
    %v284 = vmul.f32 %v251, 0.01
    %v285 = vmul.f32 %v256, 0.01
    %v286 = vmul.f32 %v259, 0.01
    %v287 = vmul.f32 %v264, 0.01
    %v288 = vmul.f32 %v267, 0.01
    %v289 = vmul.f32 %v272, 0.01
    %v290 = vmax.f32 %v224, %v277
    %v291 = vmax.f32 %v227, %v278
    %v292 = vmax.f32 %v232, %v279
    %v293 = vmax.f32 %v235, %v280
    %v294 = vmax.f32 %v240, %v281
    %v295 = vmax.f32 %v243, %v282
    %v296 = vmax.f32 %v248, %v283
    %v297 = vmax.f32 %v251, %v284
    %v298 = vmax.f32 %v256, %v285
    %v299 = vmax.f32 %v259, %v286
    %v300 = vmax.f32 %v264, %v287
    %v301 = vmax.f32 %v267, %v288
    %v302 = vmax.f32 %v272, %v289
    %v303 = vld [vmem:[%s3] sm:$0xff]
    %v304 = vld [vmem:[%s3 + $0x8] sm:$0xff]
    %v305 = vld [vmem:[%s3 + $0x10] sm:$0xff]
    %v306 = vld [vmem:[%s3 + $0x18] sm:$0xff]
    %v307 = vld [vmem:[%s3 + $0x20] sm:$0xff]
    %v308 = vld [vmem:[%s3 + $0x28] sm:$0xff]
    %v309 = vld [vmem:[%s3 + $0x30] sm:$0xff]
    %v310 = vld [vmem:[%s3 + $0x38] sm:$0xff]
    %v311 = vld [vmem:[%s3 + $0x40] sm:$0xff]
    %v312 = vld [vmem:[%s3 + $0x48] sm:$0xff]
    %v313 = vld [vmem:[%s3 + $0x50] sm:$0xff]
    %v314 = vld [vmem:[%s3 + $0x58] sm:$0xff]
    %v315 = vld [vmem:[%s3 + $0x60] sm:$0xf]
    %317 = vset.pattern.permute.xlu0 0
    %318 = vperm.xlu0 %317, %v303
    %v319 = vpop.permute.xlu0 %318
    %322 = vset.pattern.permute.xlu0 0
    %323 = vperm.xlu0 %322, %v304
    %v324 = vpop.permute.xlu0 %323
    %327 = vset.pattern.permute.xlu0 0
    %328 = vperm.xlu0 %327, %v305
    %v329 = vpop.permute.xlu0 %328
    %332 = vset.pattern.permute.xlu0 0
    %333 = vperm.xlu0 %332, %v306
    %v334 = vpop.permute.xlu0 %333
    %337 = vset.pattern.permute.xlu0 0
    %338 = vperm.xlu0 %337, %v307
    %v339 = vpop.permute.xlu0 %338
    %342 = vset.pattern.permute.xlu0 0
    %343 = vperm.xlu0 %342, %v308
    %v344 = vpop.permute.xlu0 %343
    %347 = vset.pattern.permute.xlu0 0
    %348 = vperm.xlu0 %347, %v309
    %v349 = vpop.permute.xlu0 %348
    %352 = vset.pattern.permute.xlu0 0
    %353 = vperm.xlu0 %352, %v310
    %v354 = vpop.permute.xlu0 %353
    %357 = vset.pattern.permute.xlu0 0
    %358 = vperm.xlu0 %357, %v311
    %v359 = vpop.permute.xlu0 %358
    %362 = vset.pattern.permute.xlu0 0
    %363 = vperm.xlu0 %362, %v312
    %v364 = vpop.permute.xlu0 %363
    %367 = vset.pattern.permute.xlu0 0
    %368 = vperm.xlu0 %367, %v313
    %v369 = vpop.permute.xlu0 %368
    %372 = vset.pattern.permute.xlu0 0
    %373 = vperm.xlu0 %372, %v314
    %v374 = vpop.permute.xlu0 %373
    %377 = vset.pattern.permute.xlu0 0
    %378 = vperm.xlu0 %377, %v315
    %v379 = vpop.permute.xlu0 %378
    %v381 = vmul.f32 %v319, %v290
    %v382 = vmul.f32 %v324, %v291
    %v383 = vmul.f32 %v329, %v292
    %v384 = vmul.f32 %v334, %v293
    %v385 = vmul.f32 %v339, %v294
    %v386 = vmul.f32 %v344, %v295
    %v387 = vmul.f32 %v349, %v296
    %v388 = vmul.f32 %v354, %v297
    %v389 = vmul.f32 %v359, %v298
    %v390 = vmul.f32 %v364, %v299
    %v391 = vmul.f32 %v369, %v300
    %v392 = vmul.f32 %v374, %v301
    %v393 = vmul.f32 %v379, %v302
    %v394 = vadd.f32 %v381, %v382
    %v395 = vadd.f32 %v394, %v383
    %v396 = vadd.f32 %v395, %v384
    %v397 = vadd.f32 %v396, %v385
    %v398 = vadd.f32 %v397, %v386
    %v399 = vadd.f32 %v398, %v387
    %v400 = vadd.f32 %v399, %v388
    %v401 = vadd.f32 %v400, %v389
    %v402 = vadd.f32 %v401, %v390
    %v403 = vadd.f32 %v402, %v391
    %v404 = vadd.f32 %v403, %v392
    %v405 = vsel %vm185, %v393, 0.0
    %v406 = vadd.f32 %v404, %v405
    %v407 = vrot.slane %v406, 4
    %v408 = vadd.f32 %v406, %v407
    %v409 = vrot.slane %v408, 2
    %v410 = vadd.f32 %v408, %v409
    %v411 = vrot.slane %v410, 1
    %v412 = vadd.f32 %v410, %v411
    %v413 = vxor.u32 %v412, 2147483648
    %v414 = vmul.f32 %v413, 1.442695
    %v415 = vpow.pop %v414
    %v416 = vadd.f32 %v415, 1.0
    %v417 = vrcp.pop %v416
    %v418 = vmul.f32 1.0, %v417
    %419 = vst [vmem:[#allocation2] sm:$0x1] %v418
    // Predicated region
    $region18: #{tpu_custom_call.1} parent=1 // pred_check
      _
    $region19: #{tpu_custom_call.1} parent=1 // pred_check_branch
      %421 = sbr.rel (0) target = $region21
    $region20: #{tpu_custom_call.1} parent=1 // pred_region
      %s423 = ssub.s32 16, 16
      %424 = vsyncadd [#allocation3], %s423
      %s426 = sshll.u32 [#allocation2], 4
      %s427 = int_to_ptr.vmem [resolvable:$true] %s426
      %429 = dma.vmem_to_hbm [thread:$0]  %s427, 16, %s4, [#allocation3]
    $region21: #{tpu_custom_call.1} parent=1 // pred_fallthru
      _
    // Predicated region
    $region22: #{tpu_custom_call.1} parent=1 // pred_check
      _
    $region23: #{tpu_custom_call.1} parent=1 // pred_check_branch
      %431 = sbr.rel (0) target = $region25
    $region24: #{tpu_custom_call.1} parent=1 // pred_region
      %432 = dma.done [#allocation3], 16
    $region25: #{tpu_custom_call.1} parent=1 // pred_fallthru
      _
    %433 = vsyncpa [#allocation3], 1

</llo_original>
